<compile_context>
chip_gen: v7x
topology: tpu7x:2x2x1
jax: 0.10.0
libtpu: 0.0.40
codegen_flags: <defaults>
</compile_context>

<pallas_src>
import functools
import math

import jax
import jax.numpy as jnp
from jax import lax
from jax.experimental import pallas as pl
from jax.experimental.pallas import tpu as pltpu


# Explicit scoped-VMEM ceiling (safe on v5e/v6e 128 MiB and v7x 64 MiB).
VMEM_LIMIT_BYTES = 64 * 1024 * 1024


# ---------------------------------------------------------------------------
# 1) Input projection: g[d] = sum_p x[p] @ Wi[d, p] + b[d]  (one big MXU matmul
#    per row block; x read ONCE, both directions' weights resident; bf16 out).
# ---------------------------------------------------------------------------
def _proj_kernel(x_ref, wi_ref, b_ref, o_ref, *, ndir, npieces):
    for d in range(ndir):
        acc = b_ref[d]                                        # (1, 4H) f32
        for p in range(npieces):
            acc = acc + jnp.dot(x_ref[p], wi_ref[d, p],
                                preferred_element_type=jnp.float32)
        o_ref[d] = acc.astype(o_ref.dtype)                    # (rb, 4H) bf16


def _pick_row_block(rows, target=512):
    if rows <= target:
        return rows
    rb = (target // 16) * 16
    while rb >= 16:
        if rows % rb == 0:
            return rb
        rb -= 16
    return rows


def lstm_input_projection(x, wi, b):
    """x: (P, rows, Dk) bf16.  wi: (ndir, P, Dk, 4H) bf16.  b: (ndir, 1, 4H) f32.
    Returns g: (ndir, rows, 4H) bf16."""
    P, rows, Dk = x.shape
    ndir, _, _, H4 = wi.shape
    rb = _pick_row_block(rows)
    nrb = rows // rb
    # TODO(synk): for very large 4H also block the N (4H) dimension on v7x.
    return pl.pallas_call(
        functools.partial(_proj_kernel, ndir=ndir, npieces=P),
        out_shape=jax.ShapeDtypeStruct((ndir, rows, H4), jnp.bfloat16),
        grid=(nrb,),
        in_specs=[pl.BlockSpec((P, rb, Dk), lambda r: (0, r, 0)),
                  pl.BlockSpec((ndir, P, Dk, H4), lambda r: (0, 0, 0, 0)),
                  pl.BlockSpec((ndir, 1, H4), lambda r: (0, 0, 0))],
        out_specs=pl.BlockSpec((ndir, rb, H4), lambda r: (0, r, 0)),
        compiler_params=pltpu.CompilerParams(
            dimension_semantics=("parallel",),
            vmem_limit_bytes=VMEM_LIMIT_BYTES),
    )(x, wi, b)


# ---------------------------------------------------------------------------
# 2) Recurrence: grid = (direction, time_block).  Direction is "parallel"
#    (v7x: fwd/bwd split across the two TensorCores); time is "arbitrary"
#    with resident (h, c) scratch.  Per-direction padding-tail skip.
# ---------------------------------------------------------------------------
def _lstm_rec_kernel(maxlen_ref, len_ref, g_ref, wh_ref,
                     out_ref, hn_ref, cn_ref, h_sc, c_sc,
                     *, ndir, tbl, H, nb):
    d_id = pl.program_id(0)
    s = pl.program_id(1)

    @pl.when(s == 0)                                   # new direction sweep
    def _():
        h_sc[...] = jnp.zeros(h_sc.shape, h_sc.dtype)
        c_sc[...] = jnp.zeros(c_sc.shape, c_sc.dtype)

    maxlen = maxlen_ref[0]
    lens = len_ref[...]                                # (B, 1) int32
    wh = wh_ref[...]                                   # (H, 4H) bf16

    def run_direction(is_fwd):
        start = s * tbl if is_fwd else (nb - 1 - s) * tbl
        block_valid = start < maxlen                   # per-direction tail skip

        @pl.when(jnp.logical_not(block_valid))
        def _():
            out_ref[...] = jnp.zeros(out_ref.shape, out_ref.dtype)

        @pl.when(block_valid)
        def _():
            def step(i, carry):
                loc = i if is_fwd else tbl - 1 - i     # fwd asc / bwd desc
                t = start + loc
                # TODO(synk): pad H to a 128 multiple (and B to 8) in the weight
                # layout so the gate slices below stay lane-aligned for big H.
                gates = g_ref[loc].astype(jnp.float32) + jnp.dot(
                    h_sc[...].astype(jnp.bfloat16), wh,
                    preferred_element_type=jnp.float32)        # (B, 4H) f32
                ig = jax.nn.sigmoid(gates[:, 0 * H:1 * H])
                fg = jax.nn.sigmoid(gates[:, 1 * H:2 * H])
                gg = jnp.tanh(gates[:, 2 * H:3 * H])
                og = jax.nn.sigmoid(gates[:, 3 * H:4 * H])
                c_new = fg * c_sc[...] + ig * gg
                h_new = og * jnp.tanh(c_new)
                valid = t < lens                               # (B, 1) bool
                h_sc[...] = jnp.where(valid, h_new, h_sc[...])
                c_sc[...] = jnp.where(valid, c_new, c_sc[...])
                out_ref[loc] = jnp.where(valid, h_new, 0.0).astype(out_ref.dtype)
                return carry
            lax.fori_loop(0, tbl, step, 0, unroll=True)

    if ndir == 1:
        run_direction(True)
    else:
        @pl.when(d_id == 0)
        def _():
            run_direction(True)

        @pl.when(d_id == 1)
        def _():
            run_direction(False)

    @pl.when(s == nb - 1)                               # final-step-only write
    def _():
        hn_ref[...] = h_sc[...]
        cn_ref[...] = c_sc[...]


def lstm_recurrence(g, len2d, maxlen, wh, *, tbl, out_dtype):
    """g: (ndir, T, B, 4H) bf16; len2d: (B, 1) i32; maxlen: (1,) i32;
    wh: (ndir, H, 4H) bf16.
    Returns (out (ndir, T, B, H) out_dtype, hn (ndir, B, H) f32, cn f32)."""
    ndir, T, B, H4 = g.shape
    H = H4 // 4
    nb = T // tbl

    def tmap(d, s, _ml):
        # block index along time: s for fwd (d==0), nb-1-s for bwd (d==1)
        return (d, s + d * (nb - 1 - 2 * s), 0, 0)

    in_specs = [
        pl.BlockSpec((B, 1), lambda d, s, ml: (0, 0)),
        pl.BlockSpec((None, tbl, B, H4), tmap),
        pl.BlockSpec((None, H, H4), lambda d, s, ml: (d, 0, 0)),
    ]
    out_specs = (
        pl.BlockSpec((None, tbl, B, H), tmap),
        pl.BlockSpec((None, B, H), lambda d, s, ml: (d, 0, 0)),
        pl.BlockSpec((None, B, H), lambda d, s, ml: (d, 0, 0)),
    )
    out_shape = (
        jax.ShapeDtypeStruct((ndir, T, B, H), out_dtype),
        jax.ShapeDtypeStruct((ndir, B, H), jnp.float32),
        jax.ShapeDtypeStruct((ndir, B, H), jnp.float32),
    )

    grid_spec = pltpu.PrefetchScalarGridSpec(
        num_scalar_prefetch=1,
        grid=(ndir, nb),
        in_specs=in_specs,
        out_specs=out_specs,
        scratch_shapes=[pltpu.VMEM((B, H), jnp.float32),
                        pltpu.VMEM((B, H), jnp.float32)])

    out, hn, cn = pl.pallas_call(
        functools.partial(_lstm_rec_kernel, ndir=ndir, tbl=tbl, H=H, nb=nb),
        out_shape=out_shape,
        grid_spec=grid_spec,
        compiler_params=pltpu.CompilerParams(
            dimension_semantics=("parallel", "arbitrary"),
            vmem_limit_bytes=VMEM_LIMIT_BYTES),
    )(maxlen, len2d, g, wh)
    return out, hn, cn


# ---------------------------------------------------------------------------
# 3) Bridge: both Linear+ReLU fused into one call; weights bf16.
# ---------------------------------------------------------------------------
def _bridge_kernel(x_ref, w_ref, b_ref, o_ref):
    y = jnp.dot(x_ref[0].astype(jnp.bfloat16), w_ref[0],
                preferred_element_type=jnp.float32) + b_ref[0]
    o_ref[0] = jnp.maximum(y, 0.0)


def bridge_apply(x, w, b):
    """x: (2, R, thd) f32; w: (2, thd, thd) bf16 (pre-transposed); b: (2,1,thd)."""
    S, R, thd = x.shape
    # TODO(synk): tile the output column dim for very large thd (v7x VMEM).
    return pl.pallas_call(
        _bridge_kernel,
        out_shape=jax.ShapeDtypeStruct((S, R, thd), jnp.float32),
        grid=(S,),
        in_specs=[pl.BlockSpec((1, R, thd), lambda i: (i, 0, 0)),
                  pl.BlockSpec((1, thd, thd), lambda i: (i, 0, 0)),
                  pl.BlockSpec((1, 1, thd), lambda i: (i, 0, 0))],
        out_specs=pl.BlockSpec((1, R, thd), lambda i: (i, 0, 0)),
        compiler_params=pltpu.CompilerParams(
            dimension_semantics=("parallel",),
            vmem_limit_bytes=VMEM_LIMIT_BYTES),
    )(x, w, b)


# ---------------------------------------------------------------------------
# Module wrapper
# ---------------------------------------------------------------------------
class DenoisingEncoderPallas:
    def __init__(self, bidirectional, num_layers, input_size, hidden_size,
                 dropout=0.0, use_bridge=False, key=None, time_block=8):
        num_dir = 2 if bidirectional else 1
        assert hidden_size % num_dir == 0
        self.num_layers = num_layers
        self.num_dir = num_dir
        self.hidden_size = hidden_size
        self.H = hidden_size // num_dir              # hidden per direction
        self.input_size = input_size
        self.use_bridge = use_bridge
        self.time_block = time_block                 # kept small: unroll/VMEM
        self.total_hidden_dim = self.H * num_layers
        # TODO(synk): input nn.Dropout() and inter-layer rnn dropout are
        # identity here (eval-mode semantics); `dropout` accepted but unused.

        key = jax.random.PRNGKey(0) if key is None else key
        H = self.H
        k = 1.0 / math.sqrt(H)
        self.layers = []
        for l in range(num_layers):
            if l == 0:
                npieces, piece_dim = 1, input_size
            else:
                npieces, piece_dim = num_dir, H
            din = npieces * piece_dim
            wi_dirs, wh_dirs, b_dirs = [], [], []
            for _ in range(num_dir):
                key, k1, k2, k3, k4 = jax.random.split(key, 5)
                w_ih = jax.random.uniform(k1, (4 * H, din), jnp.float32, -k, k)
                w_hh = jax.random.uniform(k2, (4 * H, H), jnp.float32, -k, k)
                b_ih = jax.random.uniform(k3, (4 * H,), jnp.float32, -k, k)
                b_hh = jax.random.uniform(k4, (4 * H,), jnp.float32, -k, k)
                # (din, 4H) -> (P, Dk, 4H): piece p multiplies direction-p input
                wi_dirs.append(w_ih.T.reshape(npieces, piece_dim, 4 * H))
                wh_dirs.append(w_hh.T)                       # (H, 4H)
                b_dirs.append((b_ih + b_hh).reshape(1, 4 * H))
            self.layers.append({
                "wi": jnp.stack(wi_dirs, 0).astype(jnp.bfloat16),  # (ndir,P,Dk,4H)
                "wh": jnp.stack(wh_dirs, 0).astype(jnp.bfloat16),  # (ndir,H,4H)
                "b": jnp.stack(b_dirs, 0),                         # (ndir,1,4H) f32
            })

        if use_bridge:
            thd = self.total_hidden_dim
            kb = 1.0 / math.sqrt(thd)
            ws, bs = [], []
            for _ in range(2):
                key, k1, k2 = jax.random.split(key, 3)
                w = jax.random.uniform(k1, (thd, thd), jnp.float32, -kb, kb)
                bias = jax.random.uniform(k2, (thd,), jnp.float32, -kb, kb)
                ws.append(w.T)                               # pre-transposed
                bs.append(bias.reshape(1, thd))
            self.bridge_w = jnp.stack(ws, 0).astype(jnp.bfloat16)  # (2,thd,thd)
            self.bridge_b = jnp.stack(bs, 0)                        # (2,1,thd) f32

    def _pick_time_block(self, T):
        tb = max(1, min(self.time_block, T))
        while T % tb != 0:
            tb -= 1
        return tb

    def __call__(self, src, lengths):
        """src: (B, T, input_size) padded; lengths: (B,) int32.
        Returns (memory_bank (B, T, hidden_size), (h_n, c_n))."""
        B, T, _ = src.shape
        tbl = self._pick_time_block(T)
        len2d = lengths.reshape(B, 1).astype(jnp.int32)
        maxlen = jnp.max(lengths).astype(jnp.int32).reshape(1)
        rows = T * B

        # x stream is only ever consumed as bf16 by the MXU: cast once.
        x = jnp.transpose(src, (1, 0, 2)).astype(jnp.bfloat16)
        x = x.reshape(1, rows, self.input_size)              # (P=1, rows, Din)

        h_list, c_list = [], []
        out = None
        for li, layer in enumerate(self.layers):
            g = lstm_input_projection(x, layer["wi"], layer["b"])  # bf16
            g = g.reshape(self.num_dir, T, B, 4 * self.H)
            last = li == self.num_layers - 1
            out_dtype = jnp.float32 if last else jnp.bfloat16
            out, hn, cn = lstm_recurrence(g, len2d, maxlen, layer["wh"],
                                          tbl=tbl, out_dtype=out_dtype)
            if not last:
                # Next layer's input pieces, no XLA slice/concat needed.
                x = out.reshape(self.num_dir, rows, self.H)
            h_list.append(hn)
            c_list.append(cn)

        # Direction concat is a free reshape; a single transpose remains.
        memory_bank = jnp.transpose(out, (2, 1, 0, 3)).reshape(
            B, T, self.num_dir * self.H)
        h_n = jnp.concatenate(h_list, 0)                     # (L*ndir, B, H)
        c_n = jnp.concatenate(c_list, 0)

        if self.use_bridge:
            thd = self.total_hidden_dim
            xb = jnp.stack([h_n.reshape(-1, thd), c_n.reshape(-1, thd)], 0)
            ob = bridge_apply(xb, self.bridge_w, self.bridge_b)
            h_n = ob[0].reshape(h_n.shape)
            c_n = ob[1].reshape(c_n.shape)
        return memory_bank, (h_n, c_n)


# ---------------------------------------------------------------------------
# Pure-JAX reference (mirrors the kernels' bf16 rounding points exactly)
# ---------------------------------------------------------------------------
def _ref_forward(enc, src, lengths):
    B, T, _ = src.shape
    rows = T * B
    x = jnp.transpose(src, (1, 0, 2)).astype(jnp.bfloat16)
    x = x.reshape(1, rows, enc.input_size)
    h_list, c_list, last_outs = [], [], None
    for li, layer in enumerate(enc.layers):
        wi, wh, b = layer["wi"], layer["wh"], layer["b"]
        ndir, P, Dk, H4 = wi.shape
        H = H4 // 4
        # projection (f32 accumulate, bf16 store — same as the kernel)
        g = []
        for d in range(ndir):
            acc = jnp.broadcast_to(b[d], (rows, H4))
            for p in range(P):
                acc = acc + jnp.dot(x[p], wi[d, p],
                                    preferred_element_type=jnp.float32)
            g.append(acc.astype(jnp.bfloat16))
        g = jnp.stack(g, 0).reshape(ndir, T, B, H4)

        last = li == len(enc.layers) - 1
        out_dtype = jnp.float32 if last else jnp.bfloat16
        outs, hns, cns = [], [], []
        for d in range(ndir):
            h = jnp.zeros((B, H), jnp.float32)
            c = jnp.zeros((B, H), jnp.float32)
            out = [None] * T
            order = range(T) if d == 0 else range(T - 1, -1, -1)
            for t in order:
                gates = g[d, t].astype(jnp.float32) + jnp.dot(
                    h.astype(jnp.bfloat16), wh[d],
                    preferred_element_type=jnp.float32)
                ig = jax.nn.sigmoid(gates[:, :H])
                fg = jax.nn.sigmoid(gates[:, H:2 * H])
                gg = jnp.tanh(gates[:, 2 * H:3 * H])
                og = jax.nn.sigmoid(gates[:, 3 * H:])
                c_new = fg * c + ig * gg
                h_new = og * jnp.tanh(c_new)
                valid = (t < lengths)[:, None]
                h = jnp.where(valid, h_new, h)
                c = jnp.where(valid, c_new, c)
                out[t] = jnp.where(valid, h_new, 0.0).astype(out_dtype)
            outs.append(jnp.stack(out, 0))
            hns.append(h)
            cns.append(c)
        h_list.append(jnp.stack(hns, 0))
        c_list.append(jnp.stack(cns, 0))
        if last:
            last_outs = jnp.stack(outs, 0)                   # (ndir, T, B, H) f32
        else:
            x = jnp.stack(outs, 0).reshape(ndir, rows, H)

    memory_bank = jnp.transpose(last_outs, (2, 1, 0, 3)).reshape(B, T, -1)
    h_n = jnp.concatenate(h_list, 0)
    c_n = jnp.concatenate(c_list, 0)
    if enc.use_bridge:
        thd = enc.total_hidden_dim
        w, bb = enc.bridge_w, enc.bridge_b
        h2 = h_n.reshape(-1, thd)
        c2 = c_n.reshape(-1, thd)
        h_n = jax.nn.relu(jnp.dot(h2.astype(jnp.bfloat16), w[0],
                                  preferred_element_type=jnp.float32)
                          + bb[0]).reshape(h_n.shape)
        c_n = jax.nn.relu(jnp.dot(c2.astype(jnp.bfloat16), w[1],
                                  preferred_element_type=jnp.float32)
                          + bb[1]).reshape(c_n.shape)
    return memory_bank, (h_n, c_n)


def _check(name, enc, src, lengths):
    mb, (h_n, c_n) = enc(src, lengths)
    jax.block_until_ready((mb, h_n, c_n))
    mb_r, (h_r, c_r) = _ref_forward(enc, src, lengths)
    tol = dict(atol=1e-2, rtol=1e-2)
    assert mb.shape == mb_r.shape, name
    assert h_n.shape == h_r.shape, name
    assert jnp.allclose(mb, mb_r, **tol), f"{name}: memory_bank mismatch"
    assert jnp.allclose(h_n, h_r, **tol), f"{name}: h_n mismatch"
    assert jnp.allclose(c_n, c_r, **tol), f"{name}: c_n mismatch"
    return mb, h_n, c_n


# ---------------------------------------------------------------------------
# main
# ---------------------------------------------------------------------------
if __name__ == "__main__":
    B, T, INPUT, HIDDEN, LAYERS = 2, 8, 8, 32, 2

    key = jax.random.PRNGKey(0)
    k_src, k1, k2, k3 = jax.random.split(key, 4)
    src = jax.random.normal(k_src, (B, T, INPUT), jnp.float32)

    # 1) bidirectional, 2 layers, bridge, single time block (nb = 1)
    enc1 = DenoisingEncoderPallas(bidirectional=True, num_layers=LAYERS,
                                  input_size=INPUT, hidden_size=HIDDEN,
                                  dropout=0.0, use_bridge=True, key=k1)
    mb1, h1, c1 = _check("bidir+bridge", enc1, src,
                         jnp.array([8, 5], jnp.int32))
    assert mb1.shape == (B, T, HIDDEN)
    assert h1.shape == (LAYERS * 2, B, HIDDEN // 2)

    # 2) bidirectional, short sequences: exercises multi-block time pipeline,
    #    resident (h, c) state across grid steps, and per-direction block skip.
    enc2 = DenoisingEncoderPallas(bidirectional=True, num_layers=1,
                                  input_size=INPUT, hidden_size=HIDDEN,
                                  use_bridge=False, key=k2, time_block=2)
    _check("bidir short", enc2, src, jnp.array([2, 1], jnp.int32))

    # 3) unidirectional, 2 layers, bridge, two time blocks.
    enc3 = DenoisingEncoderPallas(bidirectional=False, num_layers=LAYERS,
                                  input_size=INPUT, hidden_size=HIDDEN,
                                  use_bridge=True, key=k3, time_block=4)
    mb3, h3, c3 = _check("unidir+bridge", enc3, src,
                         jnp.array([7, 3], jnp.int32))
    assert mb3.shape == (B, T, HIDDEN)
    assert h3.shape == (LAYERS, B, HIDDEN)

    print("KERNEL_OK")
</pallas_src>

<mosaic_0001>
module attributes {stable_mosaic.version = 11 : i64} {
  func.func @_proj_kernel(%arg0: i32, %arg1: memref<1x16x8xbf16, #tpu.memory_space<vmem>>, %arg2: memref<2x1x8x64xbf16, #tpu.memory_space<vmem>>, %arg3: memref<2x1x64xf32, #tpu.memory_space<vmem>>, %arg4: memref<2x16x64xbf16, #tpu.memory_space<vmem>>) attributes {dimension_semantics = [#tpu.dimension_semantics<parallel>], iteration_bounds = array<i64: 1>, scalar_prefetch = 0 : i64, scratch_operands = 0 : i64, tpu.core_type = #tpu.core_type<tc>, window_params = [{transform_indices = @transform_0, window_bounds = array<i64: 1, 16, 8>}, {pipeline_mode = #tpu.pipeline_mode<synchronous>, transform_indices = @transform_1, window_bounds = array<i64: 2, 1, 8, 64>}, {pipeline_mode = #tpu.pipeline_mode<synchronous>, transform_indices = @transform_2, window_bounds = array<i64: 2, 1, 64>}, {transform_indices = @transform_3, window_bounds = array<i64: 2, 16, 64>}]} {
    %c0 = arith.constant 0 : index
    %c0_0 = arith.constant 0 : index
    %c0_1 = arith.constant 0 : index
    %0 = vector.load %arg3[%c0, %c0_0, %c0_1] : memref<2x1x64xf32, #tpu.memory_space<vmem>>, vector<1x1x64xf32>
    %1 = vector.shape_cast %0 : vector<1x1x64xf32> to vector<1x64xf32>
    %c0_2 = arith.constant 0 : index
    %c0_3 = arith.constant 0 : index
    %c0_4 = arith.constant 0 : index
    %2 = vector.load %arg1[%c0_2, %c0_3, %c0_4] : memref<1x16x8xbf16, #tpu.memory_space<vmem>>, vector<1x16x8xbf16>
    %3 = vector.shape_cast %2 : vector<1x16x8xbf16> to vector<16x8xbf16>
    %c0_5 = arith.constant 0 : index
    %c0_6 = arith.constant 0 : index
    %c0_7 = arith.constant 0 : index
    %c0_8 = arith.constant 0 : index
    %4 = vector.load %arg2[%c0_5, %c0_6, %c0_7, %c0_8] : memref<2x1x8x64xbf16, #tpu.memory_space<vmem>>, vector<1x1x8x64xbf16>
    %5 = vector.shape_cast %4 : vector<1x1x8x64xbf16> to vector<8x64xbf16>
    %cst = arith.constant dense<0.000000e+00> : vector<16x64xf32>
    %6 = tpu.matmul %3, %5, %cst {dimension_numbers = #tpu.dot_dimension_numbers<[1], [0], [0], [1], [0, 0, 1, 1], [], []>} : vector<16x8xbf16>, vector<8x64xbf16>, vector<16x64xf32> -> vector<16x64xf32>
    %7 = vector.broadcast %1 : vector<1x64xf32> to vector<16x64xf32>
    %8 = arith.addf %7, %6 : vector<16x64xf32>
    %9 = arith.truncf %8 : vector<16x64xf32> to vector<16x64xbf16>
    %c0_9 = arith.constant 0 : index
    %c0_10 = arith.constant 0 : index
    %c0_11 = arith.constant 0 : index
    %10 = vector.load %arg4[%c0_9, %c0_10, %c0_11] : memref<2x16x64xbf16, #tpu.memory_space<vmem>>, vector<1x16x64xbf16>
    %11 = vector.shape_cast %10 : vector<1x16x64xbf16> to vector<16x64xbf16>
    %12 = vector.shape_cast %9 : vector<16x64xbf16> to vector<1x16x64xbf16>
    tpu.vector_store %arg4[%c0_9, %c0_10, %c0_11], %12 {strides = array<i32>} : memref<2x16x64xbf16, #tpu.memory_space<vmem>>, vector<1x16x64xbf16>,
    %c1 = arith.constant 1 : index
    %c0_12 = arith.constant 0 : index
    %c0_13 = arith.constant 0 : index
    %13 = vector.load %arg3[%c1, %c0_12, %c0_13] : memref<2x1x64xf32, #tpu.memory_space<vmem>>, vector<1x1x64xf32>
    %14 = vector.shape_cast %13 : vector<1x1x64xf32> to vector<1x64xf32>
    %c0_14 = arith.constant 0 : index
    %c0_15 = arith.constant 0 : index
    %c0_16 = arith.constant 0 : index
    %15 = vector.load %arg1[%c0_14, %c0_15, %c0_16] : memref<1x16x8xbf16, #tpu.memory_space<vmem>>, vector<1x16x8xbf16>
    %16 = vector.shape_cast %15 : vector<1x16x8xbf16> to vector<16x8xbf16>
    %c1_17 = arith.constant 1 : index
    %c0_18 = arith.constant 0 : index
    %c0_19 = arith.constant 0 : index
    %c0_20 = arith.constant 0 : index
    %17 = vector.load %arg2[%c1_17, %c0_18, %c0_19, %c0_20] : memref<2x1x8x64xbf16, #tpu.memory_space<vmem>>, vector<1x1x8x64xbf16>
    %18 = vector.shape_cast %17 : vector<1x1x8x64xbf16> to vector<8x64xbf16>
    %cst_21 = arith.constant dense<0.000000e+00> : vector<16x64xf32>
    %19 = tpu.matmul %16, %18, %cst_21 {dimension_numbers = #tpu.dot_dimension_numbers<[1], [0], [0], [1], [0, 0, 1, 1], [], []>} : vector<16x8xbf16>, vector<8x64xbf16>, vector<16x64xf32> -> vector<16x64xf32>
    %20 = vector.broadcast %14 : vector<1x64xf32> to vector<16x64xf32>
    %21 = arith.addf %20, %19 : vector<16x64xf32>
    %22 = arith.truncf %21 : vector<16x64xf32> to vector<16x64xbf16>
    %c1_22 = arith.constant 1 : index
    %c0_23 = arith.constant 0 : index
    %c0_24 = arith.constant 0 : index
    %23 = vector.load %arg4[%c1_22, %c0_23, %c0_24] : memref<2x16x64xbf16, #tpu.memory_space<vmem>>, vector<1x16x64xbf16>
    %24 = vector.shape_cast %23 : vector<1x16x64xbf16> to vector<16x64xbf16>
    %25 = vector.shape_cast %22 : vector<16x64xbf16> to vector<1x16x64xbf16>
    tpu.vector_store %arg4[%c1_22, %c0_23, %c0_24], %25 {strides = array<i32>} : memref<2x16x64xbf16, #tpu.memory_space<vmem>>, vector<1x16x64xbf16>,
    return
  }
  func.func @transform_0(%arg0: i32) -> (i32, i32, i32) {
    %c0_i32 = arith.constant 0 : i32
    %c0_i32_0 = arith.constant 0 : i32
    %c0_i32_1 = arith.constant 0 : i32
    return %c0_i32, %arg0, %c0_i32_0 : i32, i32, i32
  }
  func.func @transform_1(%arg0: i32) -> (i32, i32, i32, i32) {
    %c0_i32 = arith.constant 0 : i32
    %c0_i32_0 = arith.constant 0 : i32
    %c0_i32_1 = arith.constant 0 : i32
    %c0_i32_2 = arith.constant 0 : i32
    %c0_i32_3 = arith.constant 0 : i32
    return %c0_i32, %c0_i32_0, %c0_i32_1, %c0_i32_2 : i32, i32, i32, i32
  }
  func.func @transform_2(%arg0: i32) -> (i32, i32, i32) {
    %c0_i32 = arith.constant 0 : i32
    %c0_i32_0 = arith.constant 0 : i32
    %c0_i32_1 = arith.constant 0 : i32
    %c0_i32_2 = arith.constant 0 : i32
    return %c0_i32, %c0_i32_0, %c0_i32_1 : i32, i32, i32
  }
  func.func @transform_3(%arg0: i32) -> (i32, i32, i32) {
    %c0_i32 = arith.constant 0 : i32
    %c0_i32_0 = arith.constant 0 : i32
    %c0_i32_1 = arith.constant 0 : i32
    return %c0_i32, %arg0, %c0_i32_0 : i32, i32, i32
  }
}

</mosaic_0001>

<llo_original>
// kernel: tpu_custom_call.1
$region0: #{tpu_custom_call.1}
  #allocation0 [shape = 'u32[]', space=smem, size = 0x4, offset = 0x4, fixed_abs, tag = 'smem constant byte address 0x4 - core index']
  #allocation1 [shape = 'u32[144,128]{1,0:T(1,128)}', space=vmem, size = 0x12000, scoped, tag = 'internal scratch']
  %s0 = inlined_call_operand.hbm [shape: bf16[1,16,8], index: 0, kind: input, shape index: {}]
  %s1 = inlined_call_operand.hbm [shape: bf16[2,1,8,64], index: 1, kind: input, shape index: {}]
  %s2 = inlined_call_operand.hbm [shape: f32[2,1,64], index: 2, kind: input, shape index: {}]
  %s3 = inlined_call_operand.hbm [shape: bf16[2,16,64], index: 3, kind: output, shape index: {}]
  %s4 = sld [smem:[#allocation0]]
  $region34: #{tpu_custom_call.1} parent=0
    _
  %s6 = ssub.s32 1, %s4
  %s7 = scalar_select 0, %s6, %s4
  $region1: #{tpu_custom_call.1} parent=0
    #allocation2 [shape = 'u8[4096]{0}', space=vmem, size = 0x1000, scoped, tag = 'input window, operand 0, single buffered']
    #allocation3 [shape = 's32[1]{0}', space=sflag, size = 0x4, scoped, tag = 'scoped memory for tpu_custom_call.1']
    #allocation4 [shape = 's32[1]{0}', space=sflag, size = 0x4, scoped, tag = 'scoped memory for tpu_custom_call.1']
    #allocation5 [shape = 'u8[4096]{0}', space=vmem, size = 0x1000, scoped, tag = 'input window, operand 1, single buffered']
    #allocation6 [shape = 's32[1]{0}', space=sflag, size = 0x4, scoped, tag = 'scoped memory for tpu_custom_call.1']
    #allocation7 [shape = 'u8[1024]{0}', space=vmem, size = 0x400, scoped, tag = 'input window, operand 2, single buffered']
    #allocation8 [shape = 'u8[8192]{0}', space=vmem, size = 0x2000, scoped, tag = 'output window, operand 0, single buffered']
    %8 = vsyncpa [#allocation3], 0
    %9 = vsyncpa [#allocation6], 0
    %10 = vsyncpa [#allocation4], 0
    // Predicated region
    $region2: #{tpu_custom_call.1} parent=1 // pred_check
      _
    $region3: #{tpu_custom_call.1} parent=1 // pred_check_branch
      %12 = sbr.rel (0) target = $region5
    $region4: #{tpu_custom_call.1} parent=1 // pred_region
      %s14 = ssub.s32 128, 128
      %15 = vsyncadd [#allocation3], %s14
      %s16 = sshll.u32 [#allocation2], 4
      %s17 = int_to_ptr.vmem [resolvable:$true] %s16
      %22 = dma.hbm_to_vmem [thread:$0]  %s0, 128, %s17, [#allocation3], 64, 64, 4
    $region5: #{tpu_custom_call.1} parent=1 // pred_fallthru
      _
    // Predicated region
    $region6: #{tpu_custom_call.1} parent=1 // pred_check
      _
    $region7: #{tpu_custom_call.1} parent=1 // pred_check_branch
      %24 = sbr.rel (0) target = $region9
    $region8: #{tpu_custom_call.1} parent=1 // pred_region
      %s26 = ssub.s32 128, 128
      %27 = vsyncadd [#allocation6], %s26
      %s28 = sshll.u32 [#allocation5], 4
      %s29 = int_to_ptr.vmem [resolvable:$true] %s28
      %34 = dma.hbm_to_vmem [thread:$0]  %s1, 128, %s29, [#allocation6], 64, 64, 4
    $region9: #{tpu_custom_call.1} parent=1 // pred_fallthru
      _
    // Predicated region
    $region10: #{tpu_custom_call.1} parent=1 // pred_check
      _
    $region11: #{tpu_custom_call.1} parent=1 // pred_check_branch
      %36 = sbr.rel (0) target = $region13
    $region12: #{tpu_custom_call.1} parent=1 // pred_region
      %s38 = ssub.s32 32, 32
      %39 = vsyncadd [#allocation6], %s38
      %s40 = sshll.u32 [#allocation7], 4
      %s41 = int_to_ptr.vmem [resolvable:$true] %s40
      %46 = dma.hbm_to_vmem [thread:$0]  %s2, 32, %s41, [#allocation6], 16, 16, 1
    $region13: #{tpu_custom_call.1} parent=1 // pred_fallthru
      _
    // Predicated region
    $region14: #{tpu_custom_call.1} parent=1 // pred_check
      _
    $region15: #{tpu_custom_call.1} parent=1 // pred_check_branch
      %48 = sbr.rel (0) target = $region17
    $region16: #{tpu_custom_call.1} parent=1 // pred_region
      %49 = dma.done [#allocation3], 128
    $region17: #{tpu_custom_call.1} parent=1 // pred_fallthru
      _
    // Predicated region
    $region18: #{tpu_custom_call.1} parent=1 // pred_check
      _
    $region19: #{tpu_custom_call.1} parent=1 // pred_check_branch
      %51 = sbr.rel (0) target = $region21
    $region20: #{tpu_custom_call.1} parent=1 // pred_region
      %52 = dma.done [#allocation6], 128
    $region21: #{tpu_custom_call.1} parent=1 // pred_fallthru
      _
    // Predicated region
    $region22: #{tpu_custom_call.1} parent=1 // pred_check
      _
    $region23: #{tpu_custom_call.1} parent=1 // pred_check_branch
      %54 = sbr.rel (0) target = $region25
    $region24: #{tpu_custom_call.1} parent=1 // pred_region
      %55 = dma.done [#allocation6], 32
    $region25: #{tpu_custom_call.1} parent=1 // pred_fallthru
      _
    %v57 = vld [vmem:[#allocation7] sm:$0x1]
    %v58 = vld [vmem:[#allocation2] sm:$0xf]
    %v59 = vld [vmem:[#allocation2 + $0x4] sm:$0xf]
    %v60 = vld [vmem:[#allocation5] sm:$0xf]
    %v63 = vunpack.c.l.b16 %v58
    %v64 = vunpack.c.l.b16 %v59
    %v65 = vpack.c.b16 %v64, %v63
    %vm66 = vcmask 64512
    %v68 = vsel %vm66, %v65, 0
    %vm70 = vcmask 1043456
    %v72 = vsel %vm70, %v60, 0
    %74 = vmatprep.subr.bf16.mxu0 0
    %75 = vmatpush1.bf16.msra.mxu0 %v72
    %76 = vmatprep.subr.bf16.mxu0 0
    %77 = vmatpush1.bf16.msra.mxu0 0
    %78 = vmatprep.subr.bf16.mxu0 0
    %79 = vmatpush1.bf16.msra.mxu0 0
    %80 = vmatprep.subr.bf16.mxu0 0
    %81 = vmatpush1.bf16.msra.mxu0 0
    %82 = vmatprep.subr.bf16.mxu0 0
    %83 = vmatpush1.bf16.msra.mxu0 0
    %84 = vmatprep.subr.bf16.mxu0 0
    %85 = vmatpush1.bf16.msra.mxu0 0
    %86 = vmatprep.subr.bf16.mxu0 0
    %87 = vmatpush1.bf16.msra.mxu0 0
    %88 = vmatprep.subr.bf16.mxu0 0
    %89 = vmatpush1.bf16.msra.mxu0 0
    %90 = vmatprep.subr.bf16.mxu0 0
    %91 = vmatpush1.bf16.msra.mxu0 0
    %92 = vmatprep.subr.bf16.mxu0 0
    %93 = vmatpush1.bf16.msra.mxu0 0
    %94 = vmatprep.subr.bf16.mxu0 0
    %95 = vmatpush1.bf16.msra.mxu0 0
    %96 = vmatprep.subr.bf16.mxu0 0
    %97 = vmatpush1.bf16.msra.mxu0 0
    %98 = vmatprep.subr.bf16.mxu0 0
    %99 = vmatpush1.bf16.msra.mxu0 0
    %100 = vmatprep.subr.bf16.mxu0 0
    %101 = vmatpush1.bf16.msra.mxu0 0
    %102 = vmatprep.subr.bf16.mxu0 0
    %103 = vmatpush1.bf16.msra.mxu0 0
    %104 = vmatprep.subr.bf16.mxu0 0
    %105 = vmatpush1.bf16.msra.mxu0 0
    %106 = vmatprep.mubr.bf16.mxu0 0
    %107 = vmatmul.mubr.bf16.gmra.mrb[0].mxu0 %v68
    %v108 = vpop.f32.mrb[0].mxu0
    %v109 = vadd.f32 0.0, %v108
    %v110 = vpop.f32.mrb[0].mxu0
    %v111 = vpop.f32.mrb[0].mxu0
    %v112 = vadd.f32 0.0, %v111
    %v113 = vpop.f32.mrb[0].mxu0
    %114 = vdwg.mxu0
    %v116 = vlaneseq
    %v117 = vshrl.u32 %v116, 7
    %v118 = vsub.s32 0, %v117
    %v119 = vrot.slane %v57, %v118
    %v121 = vadd.f32 %v119, %v109
    %v122 = vadd.f32 %v119, %v112
    %v123 = vpack.c.bf16 %v122, %v121
    %v125 = vunpack.c.l.b16 %v123
    %v126 = vunpack.c.h.b16 %v123
    %v127 = vpack.c.b16 %v125, %v125
    %v128 = vpack.c.b16 %v126, %v126
    %vm131 = vcmask 519168
    %132 = vst.msk [vmem:[#allocation8] sm:$0xf] %vm131, %v127
    %133 = vst.msk [vmem:[#allocation8 + $0x4] sm:$0xf] %vm131, %v128
    %s134 = scalar_lea.vmem [#allocation7], 1
    %v135 = vld [vmem:[%s134] sm:$0x1]
    %v136 = vld [vmem:[#allocation2] sm:$0xf]
    %v137 = vld [vmem:[#allocation2 + $0x4] sm:$0xf]
    %s138 = scalar_lea.vmem [#allocation5], 4
    %v139 = vld [vmem:[%s138] sm:$0xf]
    %v142 = vunpack.c.l.b16 %v136
    %v143 = vunpack.c.l.b16 %v137
    %v144 = vpack.c.b16 %v143, %v142
    %v146 = vsel %vm66, %v144, 0
    %v149 = vsel %vm70, %v139, 0
    %151 = vmatprep.subr.bf16.mxu0 0
    %152 = vmatpush1.bf16.msra.mxu0 %v149
    %153 = vmatprep.subr.bf16.mxu0 0
    %154 = vmatpush1.bf16.msra.mxu0 0
    %155 = vmatprep.subr.bf16.mxu0 0
    %156 = vmatpush1.bf16.msra.mxu0 0
    %157 = vmatprep.subr.bf16.mxu0 0
    %158 = vmatpush1.bf16.msra.mxu0 0
    %159 = vmatprep.subr.bf16.mxu0 0
    %160 = vmatpush1.bf16.msra.mxu0 0
    %161 = vmatprep.subr.bf16.mxu0 0
    %162 = vmatpush1.bf16.msra.mxu0 0
    %163 = vmatprep.subr.bf16.mxu0 0
    %164 = vmatpush1.bf16.msra.mxu0 0
    %165 = vmatprep.subr.bf16.mxu0 0
    %166 = vmatpush1.bf16.msra.mxu0 0
    %167 = vmatprep.subr.bf16.mxu0 0
    %168 = vmatpush1.bf16.msra.mxu0 0
    %169 = vmatprep.subr.bf16.mxu0 0
    %170 = vmatpush1.bf16.msra.mxu0 0
    %171 = vmatprep.subr.bf16.mxu0 0
    %172 = vmatpush1.bf16.msra.mxu0 0
    %173 = vmatprep.subr.bf16.mxu0 0
    %174 = vmatpush1.bf16.msra.mxu0 0
    %175 = vmatprep.subr.bf16.mxu0 0
    %176 = vmatpush1.bf16.msra.mxu0 0
    %177 = vmatprep.subr.bf16.mxu0 0
    %178 = vmatpush1.bf16.msra.mxu0 0
    %179 = vmatprep.subr.bf16.mxu0 0
    %180 = vmatpush1.bf16.msra.mxu0 0
    %181 = vmatprep.subr.bf16.mxu0 0
    %182 = vmatpush1.bf16.msra.mxu0 0
    %183 = vmatprep.mubr.bf16.mxu0 0
    %184 = vmatmul.mubr.bf16.gmra.mrb[0].mxu0 %v146
    %v185 = vpop.f32.mrb[0].mxu0
    %v186 = vadd.f32 0.0, %v185
    %v187 = vpop.f32.mrb[0].mxu0
    %v188 = vpop.f32.mrb[0].mxu0
    %v189 = vadd.f32 0.0, %v188
    %v190 = vpop.f32.mrb[0].mxu0
    %191 = vdwg.mxu0
    %v193 = vlaneseq
    %v194 = vshrl.u32 %v193, 7
    %v195 = vsub.s32 0, %v194
    %v196 = vrot.slane %v135, %v195
    %v198 = vadd.f32 %v196, %v186
    %v199 = vadd.f32 %v196, %v189
    %v200 = vpack.c.bf16 %v199, %v198
    %v202 = vunpack.c.l.b16 %v200
    %v203 = vunpack.c.h.b16 %v200
    %v204 = vpack.c.b16 %v202, %v202
    %v205 = vpack.c.b16 %v203, %v203
    %s208 = scalar_lea.vmem [#allocation8], 8
    %209 = vst.msk [vmem:[%s208] sm:$0xf] %vm131, %v204
    %210 = vst.msk [vmem:[%s208 + $0x4] sm:$0xf] %vm131, %v205
    // Predicated region
    $region26: #{tpu_custom_call.1} parent=1 // pred_check
      _
    $region27: #{tpu_custom_call.1} parent=1 // pred_check_branch
      %212 = sbr.rel (0) target = $region29
    $region28: #{tpu_custom_call.1} parent=1 // pred_region
      %s214 = ssub.s32 256, 256
      %215 = vsyncadd [#allocation4], %s214
      %s216 = sshll.u32 [#allocation8], 4
      %s217 = int_to_ptr.vmem [resolvable:$true] %s216
      %222 = dma.vmem_to_hbm [thread:$0]  %s217, 256, %s3, [#allocation4], 64, 64, 4
    $region29: #{tpu_custom_call.1} parent=1 // pred_fallthru
      _
    // Predicated region
    $region30: #{tpu_custom_call.1} parent=1 // pred_check
      _
    $region31: #{tpu_custom_call.1} parent=1 // pred_check_branch
      %224 = sbr.rel (0) target = $region33
    $region32: #{tpu_custom_call.1} parent=1 // pred_region
      %225 = dma.done [#allocation4], 256
    $region33: #{tpu_custom_call.1} parent=1 // pred_fallthru
      _
    %226 = vsyncpa [#allocation3], 1
    %227 = vsyncpa [#allocation6], 1
    %228 = vsyncpa [#allocation4], 1

</llo_original>
